<compile_context>
chip_gen: v6e
topology: v6e:2x2x1
jax: 0.10.0
libtpu: 0.0.40
codegen_flags: <defaults>
</compile_context>

<pallas_src>
import math

import jax
import jax.numpy as jnp
from jax.experimental import pallas as pl
from jax.experimental.pallas import tpu as pltpu

_H = 16  # hidden width of every MLP in the module


def _bigan_kernel(x_ref, z_ref,
                  wx_ref, wz_ref, be1_ref, bg1_ref,
                  ce_ref, cg_ref, brl_ref, bfk_ref,
                  w2r_ref, w2f_ref, b2_ref,
                  out_ref):
    f32 = jnp.float32
    x = x_ref[...].astype(f32)            # (tb, input_dim)  bf16 stream -> f32 math
    z = z_ref[...].astype(f32)            # (tb, latent_dim)

    # One dot per shared LHS: x @ [we1 | wd1x], z @ [wg1 | wd1z].
    xw = jnp.dot(x, wx_ref[...], preferred_element_type=f32)    # (tb, 2H)
    zw = jnp.dot(z, wz_ref[...], preferred_element_type=f32)    # (tb, 2H)

    he = jnp.maximum(xw[:, :_H] + be1_ref[...], 0.0)            # encoder hidden
    hg = jnp.maximum(zw[:, :_H] + bg1_ref[...], 0.0)            # generator hidden

    # enc/gen folded into composed 16x16 weights:
    #   x@wd1x + (he@we2 + be2)@wd1z + bd1  ==  xw[:, H:] + he@Ce + b_real
    #   gen@wd1x + z@wd1z + bd1             ==  zw[:, H:] + hg@Cg + b_fake
    h_real = jnp.maximum(
        xw[:, _H:] + jnp.dot(he, ce_ref[...], preferred_element_type=f32) + brl_ref[...],
        0.0)
    h_fake = jnp.maximum(
        zw[:, _H:] + jnp.dot(hg, cg_ref[...], preferred_element_type=f32) + bfk_ref[...],
        0.0)

    # Both discriminator heads -> one lane-merged (tb, 2) logit slab.
    logits = (jnp.dot(h_real, w2r_ref[...], preferred_element_type=f32)
              + jnp.dot(h_fake, w2f_ref[...], preferred_element_type=f32)
              + b2_ref[...])
    # sigmoid: exp on the EUP, approx reciprocal on the (otherwise idle) EUP slot.
    probs = pl.reciprocal(1.0 + jnp.exp(-logits), approx=True)
    out_ref[...] = probs.astype(out_ref.dtype)


def _round_up(n, m):
    return ((n + m - 1) // m) * m


def _pack_params(p):
    """Pack / compose the PyTorch-equivalent weights for the fused kernel."""
    f32 = jnp.float32
    wx = jnp.concatenate([p["we1"], p["wd1x"]], axis=1).astype(f32)       # (in,  2H)
    wz = jnp.concatenate([p["wg1"], p["wd1z"]], axis=1).astype(f32)       # (lat, 2H)
    ce = (p["we2"] @ p["wd1z"]).astype(f32)                               # (H, H)
    cg = (p["wg2"] @ p["wd1x"]).astype(f32)                               # (H, H)
    b_real = (p["be2"] @ p["wd1z"] + p["bd1"]).reshape(1, _H).astype(f32)
    b_fake = (p["bg2"] @ p["wd1x"] + p["bd1"]).reshape(1, _H).astype(f32)
    zeros = jnp.zeros_like(p["wd2"])
    w2r = jnp.concatenate([p["wd2"], zeros], axis=1).astype(f32)          # (H, 2)
    w2f = jnp.concatenate([zeros, p["wd2"]], axis=1).astype(f32)          # (H, 2)
    b2 = jnp.concatenate([p["bd2"], p["bd2"]]).reshape(1, 2).astype(f32)  # (1, 2)
    be1 = p["be1"].reshape(1, _H).astype(f32)
    bg1 = p["bg1"].reshape(1, _H).astype(f32)
    return (wx, wz, be1, bg1, ce, cg, b_real, b_fake, w2r, w2f, b2)


def bigan_ton_forward(x, z, params, block_b=4096):
    """x: (B, input_dim), z: (B, latent_dim) -> (disc_real, disc_fake), each (B, 1) f32."""
    B, input_dim = x.shape
    _, latent_dim = z.shape

    # Row tile: multiple of 16 (bf16 sublane packing).  Keep >= 2 grid steps when
    # the batch allows it (v7x megacore) and pad only to n_steps * tb.
    n_steps = max(pl.cdiv(B, block_b), 2 if B >= 32 else 1)
    tb = _round_up(pl.cdiv(B, n_steps), 16)
    Bp = n_steps * tb

    # bf16 activation stream halves the dominant HBM traffic; math stays f32.
    x = x.astype(jnp.bfloat16)
    z = z.astype(jnp.bfloat16)
    if Bp != B:
        x = jnp.pad(x, ((0, Bp - B), (0, 0)))
        z = jnp.pad(z, ((0, Bp - B), (0, 0)))

    packed = _pack_params(params)

    def resident(p):
        # Full-array block, constant index_map -> DMA'd once, stays in VMEM.
        return pl.BlockSpec(p.shape, lambda i: (0, 0))

    in_specs = [
        pl.BlockSpec((tb, input_dim), lambda i: (i, 0)),
        pl.BlockSpec((tb, latent_dim), lambda i: (i, 0)),
    ] + [resident(p) for p in packed]
    out_specs = pl.BlockSpec((tb, 2), lambda i: (i, 0))
    out_shape = jax.ShapeDtypeStruct((Bp, 2), jnp.float32)

    param_elems = sum(int(p.size) for p in packed)
    flops = 2 * Bp * (input_dim * 2 * _H + latent_dim * 2 * _H
                      + 2 * _H * _H + 2 * _H * 2)
    cost = pl.CostEstimate(
        flops=flops,
        transcendentals=2 * Bp,
        bytes_accessed=2 * Bp * (input_dim + latent_dim)  # bf16 inputs
        + 4 * param_elems                                  # resident weights (once)
        + 4 * Bp * 2,                                      # f32 merged output
    )

    out = pl.pallas_call(
        _bigan_kernel,
        grid=(Bp // tb,),
        in_specs=in_specs,
        out_specs=out_specs,
        out_shape=out_shape,
        compiler_params=pltpu.CompilerParams(
            dimension_semantics=("parallel",),       # megacore sharding on v7x
            vmem_limit_bytes=32 * 1024 * 1024,       # headroom for large tb on v5e
        ),
        cost_estimate=cost,
    )(x, z, *packed)

    return out[:B, 0:1], out[:B, 1:2]


def init_params(key, input_dim, latent_dim, hidden_dim=_H):
    """PyTorch nn.Linear default init (uniform +/- 1/sqrt(fan_in)), weights
    pre-transposed to (in_features, out_features)."""
    ks = jax.random.split(key, 12)
    d_in = input_dim + latent_dim
    bg = 1.0 / math.sqrt(latent_dim)
    be = 1.0 / math.sqrt(input_dim)
    bh = 1.0 / math.sqrt(hidden_dim)
    bd = 1.0 / math.sqrt(d_in)

    wd1 = jax.random.uniform(ks[8], (d_in, hidden_dim), jnp.float32, -bd, bd)
    return {
        # Generator
        "wg1": jax.random.uniform(ks[0], (latent_dim, hidden_dim), jnp.float32, -bg, bg),
        "bg1": jax.random.uniform(ks[1], (hidden_dim,), jnp.float32, -bg, bg),
        "wg2": jax.random.uniform(ks[2], (hidden_dim, input_dim), jnp.float32, -bh, bh),
        "bg2": jax.random.uniform(ks[3], (input_dim,), jnp.float32, -bh, bh),
        # Encoder
        "we1": jax.random.uniform(ks[4], (input_dim, hidden_dim), jnp.float32, -be, be),
        "be1": jax.random.uniform(ks[5], (hidden_dim,), jnp.float32, -be, be),
        "we2": jax.random.uniform(ks[6], (hidden_dim, latent_dim), jnp.float32, -bh, bh),
        "be2": jax.random.uniform(ks[7], (latent_dim,), jnp.float32, -bh, bh),
        # Discriminator (first-layer weight split along the torch.cat axis)
        "wd1x": wd1[:input_dim],
        "wd1z": wd1[input_dim:],
        "bd1": jax.random.uniform(ks[9], (hidden_dim,), jnp.float32, -bd, bd),
        "wd2": jax.random.uniform(ks[10], (hidden_dim, 1), jnp.float32, -bh, bh),
        "bd2": jax.random.uniform(ks[11], (1,), jnp.float32, -bh, bh),
    }


def _ref_forward(x, z, p):
    """Plain-JAX reference, same math/structure as the PyTorch module.
    Inputs are rounded through bf16 to match the kernel's streaming dtype."""
    xb = x.astype(jnp.bfloat16).astype(jnp.float32)
    zb = z.astype(jnp.bfloat16).astype(jnp.float32)
    gen = jnp.maximum(zb @ p["wg1"] + p["bg1"], 0.0) @ p["wg2"] + p["bg2"]
    enc = jnp.maximum(xb @ p["we1"] + p["be1"], 0.0) @ p["we2"] + p["be2"]

    def disc(data_part, latent_part):
        h = jnp.maximum(data_part @ p["wd1x"] + latent_part @ p["wd1z"] + p["bd1"], 0.0)
        return jax.nn.sigmoid(h @ p["wd2"] + p["bd2"])

    return disc(xb, enc), disc(gen, zb)


if __name__ == "__main__":
    input_dim = 32
    latent_dim = 16
    batch = 16

    key = jax.random.PRNGKey(0)
    k_params, k_x, k_z = jax.random.split(key, 3)
    params = init_params(k_params, input_dim, latent_dim)
    x = jax.random.normal(k_x, (batch, input_dim), jnp.float32)
    z = jax.random.normal(k_z, (batch, latent_dim), jnp.float32)

    disc_real, disc_fake = bigan_ton_forward(x, z, params)
    jax.block_until_ready((disc_real, disc_fake))

    ref_real, ref_fake = _ref_forward(x, z, params)
    assert disc_real.shape == (batch, 1) and disc_fake.shape == (batch, 1)
    # Tolerance: outputs are probabilities; residual diff comes from the approx
    # EUP reciprocal in the sigmoid and the (exact-in-math) weight composition
    # reassociation -- both well below 5e-3 (test artifact, not a kernel bug).
    assert jnp.allclose(disc_real, ref_real, atol=5e-3, rtol=5e-3)
    assert jnp.allclose(disc_fake, ref_fake, atol=5e-3, rtol=5e-3)

    print("KERNEL_OK")
</pallas_src>

<mosaic_0001>
module attributes {stable_mosaic.version = 11 : i64} {
  func.func @_bigan_kernel(%arg0: i32, %arg1: memref<16x32xbf16, #tpu.memory_space<vmem>>, %arg2: memref<16x16xbf16, #tpu.memory_space<vmem>>, %arg3: memref<32x32xf32, #tpu.memory_space<vmem>>, %arg4: memref<16x32xf32, #tpu.memory_space<vmem>>, %arg5: memref<1x16xf32, #tpu.memory_space<vmem>>, %arg6: memref<1x16xf32, #tpu.memory_space<vmem>>, %arg7: memref<16x16xf32, #tpu.memory_space<vmem>>, %arg8: memref<16x16xf32, #tpu.memory_space<vmem>>, %arg9: memref<1x16xf32, #tpu.memory_space<vmem>>, %arg10: memref<1x16xf32, #tpu.memory_space<vmem>>, %arg11: memref<16x2xf32, #tpu.memory_space<vmem>>, %arg12: memref<16x2xf32, #tpu.memory_space<vmem>>, %arg13: memref<1x2xf32, #tpu.memory_space<vmem>>, %arg14: memref<16x2xf32, #tpu.memory_space<vmem>>) attributes {dimension_semantics = [#tpu.dimension_semantics<parallel>], iteration_bounds = array<i64: 1>, scalar_prefetch = 0 : i64, scratch_operands = 0 : i64, tpu.core_type = #tpu.core_type<tc>, window_params = [{transform_indices = @transform_0, window_bounds = array<i64: 16, 32>}, {transform_indices = @transform_1, window_bounds = array<i64: 16, 16>}, {pipeline_mode = #tpu.pipeline_mode<synchronous>, transform_indices = @transform_2, window_bounds = array<i64: 32, 32>}, {pipeline_mode = #tpu.pipeline_mode<synchronous>, transform_indices = @transform_3, window_bounds = array<i64: 16, 32>}, {pipeline_mode = #tpu.pipeline_mode<synchronous>, transform_indices = @transform_4, window_bounds = array<i64: 1, 16>}, {pipeline_mode = #tpu.pipeline_mode<synchronous>, transform_indices = @transform_5, window_bounds = array<i64: 1, 16>}, {pipeline_mode = #tpu.pipeline_mode<synchronous>, transform_indices = @transform_6, window_bounds = array<i64: 16, 16>}, {pipeline_mode = #tpu.pipeline_mode<synchronous>, transform_indices = @transform_7, window_bounds = array<i64: 16, 16>}, {pipeline_mode = #tpu.pipeline_mode<synchronous>, transform_indices = @transform_8, window_bounds = array<i64: 1, 16>}, {pipeline_mode = #tpu.pipeline_mode<synchronous>, transform_indices = @transform_9, window_bounds = array<i64: 1, 16>}, {pipeline_mode = #tpu.pipeline_mode<synchronous>, transform_indices = @transform_10, window_bounds = array<i64: 16, 2>}, {pipeline_mode = #tpu.pipeline_mode<synchronous>, transform_indices = @transform_11, window_bounds = array<i64: 16, 2>}, {pipeline_mode = #tpu.pipeline_mode<synchronous>, transform_indices = @transform_12, window_bounds = array<i64: 1, 2>}, {transform_indices = @transform_13, window_bounds = array<i64: 16, 2>}]} {
    %c0 = arith.constant 0 : index
    %c0_0 = arith.constant 0 : index
    %0 = vector.load %arg1[%c0, %c0_0] : memref<16x32xbf16, #tpu.memory_space<vmem>>, vector<16x32xbf16>
    %1 = arith.extf %0 : vector<16x32xbf16> to vector<16x32xf32>
    %c0_1 = arith.constant 0 : index
    %c0_2 = arith.constant 0 : index
    %2 = vector.load %arg2[%c0_1, %c0_2] : memref<16x16xbf16, #tpu.memory_space<vmem>>, vector<16x16xbf16>
    %3 = arith.extf %2 : vector<16x16xbf16> to vector<16x16xf32>
    %c0_3 = arith.constant 0 : index
    %c0_4 = arith.constant 0 : index
    %4 = vector.load %arg3[%c0_3, %c0_4] : memref<32x32xf32, #tpu.memory_space<vmem>>, vector<32x32xf32>
    %cst = arith.constant dense<0.000000e+00> : vector<16x32xf32>
    %5 = tpu.matmul %1, %4, %cst {dimension_numbers = #tpu.dot_dimension_numbers<[1], [0], [0], [1], [0, 0, 1, 1], [], []>} : vector<16x32xf32>, vector<32x32xf32>, vector<16x32xf32> -> vector<16x32xf32>
    %c0_5 = arith.constant 0 : index
    %c0_6 = arith.constant 0 : index
    %6 = vector.load %arg4[%c0_5, %c0_6] : memref<16x32xf32, #tpu.memory_space<vmem>>, vector<16x32xf32>
    %cst_7 = arith.constant dense<0.000000e+00> : vector<16x32xf32>
    %7 = tpu.matmul %3, %6, %cst_7 {dimension_numbers = #tpu.dot_dimension_numbers<[1], [0], [0], [1], [0, 0, 1, 1], [], []>} : vector<16x16xf32>, vector<16x32xf32>, vector<16x32xf32> -> vector<16x32xf32>
    %8 = vector.extract_strided_slice %5 {offsets = [0, 0], sizes = [16, 16], strides = [1, 1]} : vector<16x32xf32> to vector<16x16xf32>
    %c0_8 = arith.constant 0 : index
    %c0_9 = arith.constant 0 : index
    %9 = vector.load %arg5[%c0_8, %c0_9] : memref<1x16xf32, #tpu.memory_space<vmem>>, vector<1x16xf32>
    %10 = vector.broadcast %9 : vector<1x16xf32> to vector<16x16xf32>
    %11 = arith.addf %8, %10 : vector<16x16xf32>
    %cst_10 = arith.constant 0.000000e+00 : f32
    %12 = vector.broadcast %cst_10 : f32 to vector<16x16xf32>
    %13 = arith.maximumf %11, %12 : vector<16x16xf32>
    %14 = vector.extract_strided_slice %7 {offsets = [0, 0], sizes = [16, 16], strides = [1, 1]} : vector<16x32xf32> to vector<16x16xf32>
    %c0_11 = arith.constant 0 : index
    %c0_12 = arith.constant 0 : index
    %15 = vector.load %arg6[%c0_11, %c0_12] : memref<1x16xf32, #tpu.memory_space<vmem>>, vector<1x16xf32>
    %16 = vector.broadcast %15 : vector<1x16xf32> to vector<16x16xf32>
    %17 = arith.addf %14, %16 : vector<16x16xf32>
    %cst_13 = arith.constant 0.000000e+00 : f32
    %18 = vector.broadcast %cst_13 : f32 to vector<16x16xf32>
    %19 = arith.maximumf %17, %18 : vector<16x16xf32>
    %20 = vector.extract_strided_slice %5 {offsets = [0, 16], sizes = [16, 16], strides = [1, 1]} : vector<16x32xf32> to vector<16x16xf32>
    %c0_14 = arith.constant 0 : index
    %c0_15 = arith.constant 0 : index
    %21 = vector.load %arg7[%c0_14, %c0_15] : memref<16x16xf32, #tpu.memory_space<vmem>>, vector<16x16xf32>
    %cst_16 = arith.constant dense<0.000000e+00> : vector<16x16xf32>
    %22 = tpu.matmul %13, %21, %cst_16 {dimension_numbers = #tpu.dot_dimension_numbers<[1], [0], [0], [1], [0, 0, 1, 1], [], []>} : vector<16x16xf32>, vector<16x16xf32>, vector<16x16xf32> -> vector<16x16xf32>
    %23 = arith.addf %20, %22 : vector<16x16xf32>
    %c0_17 = arith.constant 0 : index
    %c0_18 = arith.constant 0 : index
    %24 = vector.load %arg9[%c0_17, %c0_18] : memref<1x16xf32, #tpu.memory_space<vmem>>, vector<1x16xf32>
    %25 = vector.broadcast %24 : vector<1x16xf32> to vector<16x16xf32>
    %26 = arith.addf %23, %25 : vector<16x16xf32>
    %cst_19 = arith.constant 0.000000e+00 : f32
    %27 = vector.broadcast %cst_19 : f32 to vector<16x16xf32>
    %28 = arith.maximumf %26, %27 : vector<16x16xf32>
    %29 = vector.extract_strided_slice %7 {offsets = [0, 16], sizes = [16, 16], strides = [1, 1]} : vector<16x32xf32> to vector<16x16xf32>
    %c0_20 = arith.constant 0 : index
    %c0_21 = arith.constant 0 : index
    %30 = vector.load %arg8[%c0_20, %c0_21] : memref<16x16xf32, #tpu.memory_space<vmem>>, vector<16x16xf32>
    %cst_22 = arith.constant dense<0.000000e+00> : vector<16x16xf32>
    %31 = tpu.matmul %19, %30, %cst_22 {dimension_numbers = #tpu.dot_dimension_numbers<[1], [0], [0], [1], [0, 0, 1, 1], [], []>} : vector<16x16xf32>, vector<16x16xf32>, vector<16x16xf32> -> vector<16x16xf32>
    %32 = arith.addf %29, %31 : vector<16x16xf32>
    %c0_23 = arith.constant 0 : index
    %c0_24 = arith.constant 0 : index
    %33 = vector.load %arg10[%c0_23, %c0_24] : memref<1x16xf32, #tpu.memory_space<vmem>>, vector<1x16xf32>
    %34 = vector.broadcast %33 : vector<1x16xf32> to vector<16x16xf32>
    %35 = arith.addf %32, %34 : vector<16x16xf32>
    %cst_25 = arith.constant 0.000000e+00 : f32
    %36 = vector.broadcast %cst_25 : f32 to vector<16x16xf32>
    %37 = arith.maximumf %35, %36 : vector<16x16xf32>
    %c0_26 = arith.constant 0 : index
    %c0_27 = arith.constant 0 : index
    %38 = vector.load %arg11[%c0_26, %c0_27] : memref<16x2xf32, #tpu.memory_space<vmem>>, vector<16x2xf32>
    %cst_28 = arith.constant dense<0.000000e+00> : vector<16x2xf32>
    %39 = tpu.matmul %28, %38, %cst_28 {dimension_numbers = #tpu.dot_dimension_numbers<[1], [0], [0], [1], [0, 0, 1, 1], [], []>} : vector<16x16xf32>, vector<16x2xf32>, vector<16x2xf32> -> vector<16x2xf32>
    %c0_29 = arith.constant 0 : index
    %c0_30 = arith.constant 0 : index
    %40 = vector.load %arg12[%c0_29, %c0_30] : memref<16x2xf32, #tpu.memory_space<vmem>>, vector<16x2xf32>
    %cst_31 = arith.constant dense<0.000000e+00> : vector<16x2xf32>
    %41 = tpu.matmul %37, %40, %cst_31 {dimension_numbers = #tpu.dot_dimension_numbers<[1], [0], [0], [1], [0, 0, 1, 1], [], []>} : vector<16x16xf32>, vector<16x2xf32>, vector<16x2xf32> -> vector<16x2xf32>
    %42 = arith.addf %39, %41 : vector<16x2xf32>
    %c0_32 = arith.constant 0 : index
    %c0_33 = arith.constant 0 : index
    %43 = vector.load %arg13[%c0_32, %c0_33] : memref<1x2xf32, #tpu.memory_space<vmem>>, vector<1x2xf32>
    %44 = vector.broadcast %43 : vector<1x2xf32> to vector<16x2xf32>
    %45 = arith.addf %42, %44 : vector<16x2xf32>
    %cst_34 = arith.constant 0.000000e+00 : f32
    %46 = vector.broadcast %cst_34 : f32 to vector<16x2xf32>
    %47 = arith.subf %46, %45 : vector<16x2xf32>
    %48 = math.exp %47 : vector<16x2xf32>
    %cst_35 = arith.constant 1.000000e+00 : f32
    %49 = vector.broadcast %cst_35 : f32 to vector<16x2xf32>
    %50 = arith.addf %49, %48 : vector<16x2xf32>
    %51 = tpu.reciprocal %50 {approx = true} : vector<16x2xf32> -> vector<16x2xf32>
    %c0_36 = arith.constant 0 : index
    %c0_37 = arith.constant 0 : index
    %52 = vector.load %arg14[%c0_36, %c0_37] : memref<16x2xf32, #tpu.memory_space<vmem>>, vector<16x2xf32>
    tpu.vector_store %arg14[%c0_36, %c0_37], %51 {strides = array<i32>} : memref<16x2xf32, #tpu.memory_space<vmem>>, vector<16x2xf32>,
    return
  }
  func.func @transform_0(%arg0: i32) -> (i32, i32) {
    %c0_i32 = arith.constant 0 : i32
    %c0_i32_0 = arith.constant 0 : i32
    return %arg0, %c0_i32 : i32, i32
  }
  func.func @transform_1(%arg0: i32) -> (i32, i32) {
    %c0_i32 = arith.constant 0 : i32
    %c0_i32_0 = arith.constant 0 : i32
    return %arg0, %c0_i32 : i32, i32
  }
  func.func @transform_2(%arg0: i32) -> (i32, i32) {
    %c0_i32 = arith.constant 0 : i32
    %c0_i32_0 = arith.constant 0 : i32
    %c0_i32_1 = arith.constant 0 : i32
    return %c0_i32, %c0_i32_0 : i32, i32
  }
  func.func @transform_3(%arg0: i32) -> (i32, i32) {
    %c0_i32 = arith.constant 0 : i32
    %c0_i32_0 = arith.constant 0 : i32
    %c0_i32_1 = arith.constant 0 : i32
    return %c0_i32, %c0_i32_0 : i32, i32
  }
  func.func @transform_4(%arg0: i32) -> (i32, i32) {
    %c0_i32 = arith.constant 0 : i32
    %c0_i32_0 = arith.constant 0 : i32
    %c0_i32_1 = arith.constant 0 : i32
    return %c0_i32, %c0_i32_0 : i32, i32
  }
  func.func @transform_5(%arg0: i32) -> (i32, i32) {
    %c0_i32 = arith.constant 0 : i32
    %c0_i32_0 = arith.constant 0 : i32
    %c0_i32_1 = arith.constant 0 : i32
    return %c0_i32, %c0_i32_0 : i32, i32
  }
  func.func @transform_6(%arg0: i32) -> (i32, i32) {
    %c0_i32 = arith.constant 0 : i32
    %c0_i32_0 = arith.constant 0 : i32
    %c0_i32_1 = arith.constant 0 : i32
    return %c0_i32, %c0_i32_0 : i32, i32
  }
  func.func @transform_7(%arg0: i32) -> (i32, i32) {
    %c0_i32 = arith.constant 0 : i32
    %c0_i32_0 = arith.constant 0 : i32
    %c0_i32_1 = arith.constant 0 : i32
    return %c0_i32, %c0_i32_0 : i32, i32
  }
  func.func @transform_8(%arg0: i32) -> (i32, i32) {
    %c0_i32 = arith.constant 0 : i32
    %c0_i32_0 = arith.constant 0 : i32
    %c0_i32_1 = arith.constant 0 : i32
    return %c0_i32, %c0_i32_0 : i32, i32
  }
  func.func @transform_9(%arg0: i32) -> (i32, i32) {
    %c0_i32 = arith.constant 0 : i32
    %c0_i32_0 = arith.constant 0 : i32
    %c0_i32_1 = arith.constant 0 : i32
    return %c0_i32, %c0_i32_0 : i32, i32
  }
  func.func @transform_10(%arg0: i32) -> (i32, i32) {
    %c0_i32 = arith.constant 0 : i32
    %c0_i32_0 = arith.constant 0 : i32
    %c0_i32_1 = arith.constant 0 : i32
    return %c0_i32, %c0_i32_0 : i32, i32
  }
  func.func @transform_11(%arg0: i32) -> (i32, i32) {
    %c0_i32 = arith.constant 0 : i32
    %c0_i32_0 = arith.constant 0 : i32
    %c0_i32_1 = arith.constant 0 : i32
    return %c0_i32, %c0_i32_0 : i32, i32
  }
  func.func @transform_12(%arg0: i32) -> (i32, i32) {
    %c0_i32 = arith.constant 0 : i32
    %c0_i32_0 = arith.constant 0 : i32
    %c0_i32_1 = arith.constant 0 : i32
    return %c0_i32, %c0_i32_0 : i32, i32
  }
  func.func @transform_13(%arg0: i32) -> (i32, i32) {
    %c0_i32 = arith.constant 0 : i32
    %c0_i32_0 = arith.constant 0 : i32
    return %arg0, %c0_i32 : i32, i32
  }
}

</mosaic_0001>

<llo_original>
// kernel: tpu_custom_call.1
$region0: #{tpu_custom_call.1}
  #allocation0 [shape = 'u32[]', space=smem, size = 0x4, offset = 0x4, fixed_abs, tag = 'smem constant byte address 0x4 - core index']
  #allocation1 [shape = 'u32[144,128]{1,0:T(1,128)}', space=vmem, size = 0x12000, scoped, tag = 'internal scratch']
  %s0 = inlined_call_operand.hbm [shape: bf16[16,32], index: 0, kind: input, shape index: {}]
  %s1 = inlined_call_operand.hbm [shape: bf16[16,16], index: 1, kind: input, shape index: {}]
  %s2 = inlined_call_operand.vmem [shape: f32[32,32], index: 2, kind: input, shape index: {}]
  %s3 = inlined_call_operand.hbm [shape: f32[16,32], index: 3, kind: input, shape index: {}]
  %s4 = inlined_call_operand.hbm [shape: f32[1,16], index: 4, kind: input, shape index: {}]
  %s5 = inlined_call_operand.hbm [shape: f32[1,16], index: 5, kind: input, shape index: {}]
  %s6 = inlined_call_operand.hbm [shape: f32[16,16], index: 6, kind: input, shape index: {}]
  %s7 = inlined_call_operand.vmem [shape: f32[16,16], index: 7, kind: input, shape index: {}]
  %s8 = inlined_call_operand.hbm [shape: f32[1,16], index: 8, kind: input, shape index: {}]
  %s9 = inlined_call_operand.hbm [shape: f32[1,16], index: 9, kind: input, shape index: {}]
  %s10 = inlined_call_operand.vmem [shape: f32[16,2], index: 10, kind: input, shape index: {}]
  %s11 = inlined_call_operand.vmem [shape: f32[16,2], index: 11, kind: input, shape index: {}]
  %s12 = inlined_call_operand.vmem [shape: f32[1,2], index: 12, kind: input, shape index: {}]
  %s13 = inlined_call_operand.vmem [shape: f32[16,2], index: 13, kind: output, shape index: {}]
  %s14 = sld [smem:[#allocation0]]
  $region94: #{tpu_custom_call.1} parent=0
    _
  %s16 = ssub.s32 1, %s14
  %s17 = scalar_select 0, %s16, %s14
  $region1: #{tpu_custom_call.1} parent=0
    #allocation2 [shape = 'u8[4096]{0}', space=vmem, size = 0x1000, scoped, tag = 'input window, operand 0, single buffered']
    #allocation3 [shape = 's32[1]{0}', space=sflag, size = 0x4, scoped, tag = 'scoped memory for tpu_custom_call.1']
    #allocation4 [shape = 'u8[4096]{0}', space=vmem, size = 0x1000, scoped, tag = 'input window, operand 1, single buffered']
    #allocation5 [shape = 's32[1]{0}', space=sflag, size = 0x4, scoped, tag = 'scoped memory for tpu_custom_call.1']
    #allocation6 [shape = 'u8[8192]{0}', space=vmem, size = 0x2000, scoped, tag = 'input window, operand 3, single buffered']
    #allocation7 [shape = 'u8[512]{0}', space=vmem, size = 0x400, scoped, tag = 'input window, operand 4, single buffered']
    #allocation8 [shape = 's32[1]{0}', space=sflag, size = 0x4, scoped, tag = 'scoped memory for tpu_custom_call.1']
    #allocation9 [shape = 'u8[512]{0}', space=vmem, size = 0x400, scoped, tag = 'input window, operand 5, single buffered']
    #allocation10 [shape = 'u8[8192]{0}', space=vmem, size = 0x2000, scoped, tag = 'input window, operand 6, single buffered']
    #allocation11 [shape = 's32[1]{0}', space=sflag, size = 0x4, scoped, tag = 'scoped memory for tpu_custom_call.1']
    #allocation12 [shape = 'u8[512]{0}', space=vmem, size = 0x400, scoped, tag = 'input window, operand 8, single buffered']
    #allocation13 [shape = 'u8[512]{0}', space=vmem, size = 0x400, scoped, tag = 'input window, operand 9, single buffered']
    #allocation14 [shape = 's32[1]{0}', space=sflag, size = 0x4, scoped, tag = 'scoped memory for tpu_custom_call.1']
    %18 = vsyncpa [#allocation3], 0
    %19 = vsyncpa [#allocation5], 0
    %20 = vsyncpa [#allocation8], 0
    %21 = vsyncpa [#allocation11], 0
    %22 = vsyncpa [#allocation14], 0
    // Predicated region
    $region2: #{tpu_custom_call.1} parent=1 // pred_check
      _
    $region3: #{tpu_custom_call.1} parent=1 // pred_check_branch
      %24 = sbr.rel (0) target = $region5
    $region4: #{tpu_custom_call.1} parent=1 // pred_region
      %s26 = ssub.s32 128, 128
      %27 = vsyncadd [#allocation3], %s26
      %s28 = sshll.u32 [#allocation2], 4
      %s29 = int_to_ptr.vmem [resolvable:$true] %s28
      %34 = dma.hbm_to_vmem [thread:$0]  %s0, 128, %s29, [#allocation3], 64, 64, 4
    $region5: #{tpu_custom_call.1} parent=1 // pred_fallthru
      _
    // Predicated region
    $region6: #{tpu_custom_call.1} parent=1 // pred_check
      _
    $region7: #{tpu_custom_call.1} parent=1 // pred_check_branch
      %36 = sbr.rel (0) target = $region9
    $region8: #{tpu_custom_call.1} parent=1 // pred_region
      %s38 = ssub.s32 128, 128
      %39 = vsyncadd [#allocation5], %s38
      %s40 = sshll.u32 [#allocation4], 4
      %s41 = int_to_ptr.vmem [resolvable:$true] %s40
      %46 = dma.hbm_to_vmem [thread:$0]  %s1, 128, %s41, [#allocation5], 64, 64, 4
    $region9: #{tpu_custom_call.1} parent=1 // pred_fallthru
      _
    // Predicated region
    $region10: #{tpu_custom_call.1} parent=1 // pred_check
      _
    $region11: #{tpu_custom_call.1} parent=1 // pred_check_branch
      %48 = sbr.rel (0) target = $region13
    $region12: #{tpu_custom_call.1} parent=1 // pred_region
      _
    $region13: #{tpu_custom_call.1} parent=1 // pred_fallthru
      _
    // Predicated region
    $region14: #{tpu_custom_call.1} parent=1 // pred_check
      _
    $region15: #{tpu_custom_call.1} parent=1 // pred_check_branch
      %50 = sbr.rel (0) target = $region17
    $region16: #{tpu_custom_call.1} parent=1 // pred_region
      %s52 = ssub.s32 256, 256
      %53 = vsyncadd [#allocation5], %s52
      %s54 = sshll.u32 [#allocation6], 4
      %s55 = int_to_ptr.vmem [resolvable:$true] %s54
      %60 = dma.hbm_to_vmem [thread:$0]  %s3, 256, %s55, [#allocation5], 128, 128, 8
    $region17: #{tpu_custom_call.1} parent=1 // pred_fallthru
      _
    // Predicated region
    $region18: #{tpu_custom_call.1} parent=1 // pred_check
      _
    $region19: #{tpu_custom_call.1} parent=1 // pred_check_branch
      %62 = sbr.rel (0) target = $region21
    $region20: #{tpu_custom_call.1} parent=1 // pred_region
      %s64 = ssub.s32 16, 16
      %65 = vsyncadd [#allocation8], %s64
      %s67 = sshll.u32 [#allocation7], 4
      %s68 = int_to_ptr.vmem [resolvable:$true] %s67
      %70 = dma.hbm_to_vmem [thread:$0]  %s4, 16, %s68, [#allocation8]
    $region21: #{tpu_custom_call.1} parent=1 // pred_fallthru
      _
    // Predicated region
    $region22: #{tpu_custom_call.1} parent=1 // pred_check
      _
    $region23: #{tpu_custom_call.1} parent=1 // pred_check_branch
      %72 = sbr.rel (0) target = $region25
    $region24: #{tpu_custom_call.1} parent=1 // pred_region
      %s74 = ssub.s32 16, 16
      %75 = vsyncadd [#allocation8], %s74
      %s77 = sshll.u32 [#allocation9], 4
      %s78 = int_to_ptr.vmem [resolvable:$true] %s77
      %80 = dma.hbm_to_vmem [thread:$0]  %s5, 16, %s78, [#allocation8]
    $region25: #{tpu_custom_call.1} parent=1 // pred_fallthru
      _
    // Predicated region
    $region26: #{tpu_custom_call.1} parent=1 // pred_check
      _
    $region27: #{tpu_custom_call.1} parent=1 // pred_check_branch
      %82 = sbr.rel (0) target = $region29
    $region28: #{tpu_custom_call.1} parent=1 // pred_region
      %s84 = ssub.s32 256, 256
      %85 = vsyncadd [#allocation11], %s84
      %s86 = sshll.u32 [#allocation10], 4
      %s87 = int_to_ptr.vmem [resolvable:$true] %s86
      %92 = dma.hbm_to_vmem [thread:$0]  %s6, 256, %s87, [#allocation11], 128, 128, 8
    $region29: #{tpu_custom_call.1} parent=1 // pred_fallthru
      _
    // Predicated region
    $region30: #{tpu_custom_call.1} parent=1 // pred_check
      _
    $region31: #{tpu_custom_call.1} parent=1 // pred_check_branch
      %94 = sbr.rel (0) target = $region33
    $region32: #{tpu_custom_call.1} parent=1 // pred_region
      _
    $region33: #{tpu_custom_call.1} parent=1 // pred_fallthru
      _
    // Predicated region
    $region34: #{tpu_custom_call.1} parent=1 // pred_check
      _
    $region35: #{tpu_custom_call.1} parent=1 // pred_check_branch
      %96 = sbr.rel (0) target = $region37
    $region36: #{tpu_custom_call.1} parent=1 // pred_region
      %s98 = ssub.s32 16, 16
      %99 = vsyncadd [#allocation11], %s98
      %s101 = sshll.u32 [#allocation12], 4
      %s102 = int_to_ptr.vmem [resolvable:$true] %s101
      %104 = dma.hbm_to_vmem [thread:$0]  %s8, 16, %s102, [#allocation11]
    $region37: #{tpu_custom_call.1} parent=1 // pred_fallthru
      _
    // Predicated region
    $region38: #{tpu_custom_call.1} parent=1 // pred_check
      _
    $region39: #{tpu_custom_call.1} parent=1 // pred_check_branch
      %106 = sbr.rel (0) target = $region41
    $region40: #{tpu_custom_call.1} parent=1 // pred_region
      %s108 = ssub.s32 16, 16
      %109 = vsyncadd [#allocation14], %s108
      %s111 = sshll.u32 [#allocation13], 4
      %s112 = int_to_ptr.vmem [resolvable:$true] %s111
      %114 = dma.hbm_to_vmem [thread:$0]  %s9, 16, %s112, [#allocation14]
    $region41: #{tpu_custom_call.1} parent=1 // pred_fallthru
      _
    // Predicated region
    $region42: #{tpu_custom_call.1} parent=1 // pred_check
      _
    $region43: #{tpu_custom_call.1} parent=1 // pred_check_branch
      %116 = sbr.rel (0) target = $region45
    $region44: #{tpu_custom_call.1} parent=1 // pred_region
      _
    $region45: #{tpu_custom_call.1} parent=1 // pred_fallthru
      _
    // Predicated region
    $region46: #{tpu_custom_call.1} parent=1 // pred_check
      _
    $region47: #{tpu_custom_call.1} parent=1 // pred_check_branch
      %118 = sbr.rel (0) target = $region49
    $region48: #{tpu_custom_call.1} parent=1 // pred_region
      _
    $region49: #{tpu_custom_call.1} parent=1 // pred_fallthru
      _
    // Predicated region
    $region50: #{tpu_custom_call.1} parent=1 // pred_check
      _
    $region51: #{tpu_custom_call.1} parent=1 // pred_check_branch
      %120 = sbr.rel (0) target = $region53
    $region52: #{tpu_custom_call.1} parent=1 // pred_region
      _
    $region53: #{tpu_custom_call.1} parent=1 // pred_fallthru
      _
    // Predicated region
    $region54: #{tpu_custom_call.1} parent=1 // pred_check
      _
    $region55: #{tpu_custom_call.1} parent=1 // pred_check_branch
      %122 = sbr.rel (0) target = $region57
    $region56: #{tpu_custom_call.1} parent=1 // pred_region
      %123 = dma.done [#allocation3], 128
    $region57: #{tpu_custom_call.1} parent=1 // pred_fallthru
      _
    // Predicated region
    $region58: #{tpu_custom_call.1} parent=1 // pred_check
      _
    $region59: #{tpu_custom_call.1} parent=1 // pred_check_branch
      %125 = sbr.rel (0) target = $region61
    $region60: #{tpu_custom_call.1} parent=1 // pred_region
      %126 = dma.done [#allocation5], 128
    $region61: #{tpu_custom_call.1} parent=1 // pred_fallthru
      _
    // Predicated region
    $region62: #{tpu_custom_call.1} parent=1 // pred_check
      _
    $region63: #{tpu_custom_call.1} parent=1 // pred_check_branch
      %128 = sbr.rel (0) target = $region65
    $region64: #{tpu_custom_call.1} parent=1 // pred_region
      %129 = dma.done [#allocation5], 256
    $region65: #{tpu_custom_call.1} parent=1 // pred_fallthru
      _
    // Predicated region
    $region66: #{tpu_custom_call.1} parent=1 // pred_check
      _
    $region67: #{tpu_custom_call.1} parent=1 // pred_check_branch
      %131 = sbr.rel (0) target = $region69
    $region68: #{tpu_custom_call.1} parent=1 // pred_region
      %132 = dma.done [#allocation8], 16
    $region69: #{tpu_custom_call.1} parent=1 // pred_fallthru
      _
    // Predicated region
    $region70: #{tpu_custom_call.1} parent=1 // pred_check
      _
    $region71: #{tpu_custom_call.1} parent=1 // pred_check_branch
      %134 = sbr.rel (0) target = $region73
    $region72: #{tpu_custom_call.1} parent=1 // pred_region
      %135 = dma.done [#allocation8], 16
    $region73: #{tpu_custom_call.1} parent=1 // pred_fallthru
      _
    // Predicated region
    $region74: #{tpu_custom_call.1} parent=1 // pred_check
      _
    $region75: #{tpu_custom_call.1} parent=1 // pred_check_branch
      %137 = sbr.rel (0) target = $region77
    $region76: #{tpu_custom_call.1} parent=1 // pred_region
      %138 = dma.done [#allocation11], 256
    $region77: #{tpu_custom_call.1} parent=1 // pred_fallthru
      _
    // Predicated region
    $region78: #{tpu_custom_call.1} parent=1 // pred_check
      _
    $region79: #{tpu_custom_call.1} parent=1 // pred_check_branch
      %140 = sbr.rel (0) target = $region81
    $region80: #{tpu_custom_call.1} parent=1 // pred_region
      %141 = dma.done [#allocation11], 16
    $region81: #{tpu_custom_call.1} parent=1 // pred_fallthru
      _
    // Predicated region
    $region82: #{tpu_custom_call.1} parent=1 // pred_check
      _
    $region83: #{tpu_custom_call.1} parent=1 // pred_check_branch
      %143 = sbr.rel (0) target = $region85
    $region84: #{tpu_custom_call.1} parent=1 // pred_region
      %144 = dma.done [#allocation14], 16
    $region85: #{tpu_custom_call.1} parent=1 // pred_fallthru
      _
    %v145 = vld [vmem:[#allocation2] sm:$0xf]
    %v146 = vld [vmem:[#allocation2 + $0x4] sm:$0xf]
    %v147 = vunpack.c.l.bf16 %v145
    %v148 = vunpack.c.l.bf16 %v146
    %v149 = vld [vmem:[#allocation4] sm:$0xf]
    %v150 = vld [vmem:[#allocation4 + $0x4] sm:$0xf]
    %v151 = vunpack.c.l.bf16 %v149
    %v152 = vunpack.c.l.bf16 %v150
    %v153 = vld [vmem:[%s2] sm:$0xff]
    %v154 = vld [vmem:[%s2 + $0x8] sm:$0xff]
    %v155 = vld [vmem:[%s2 + $0x10] sm:$0xff]
    %v156 = vld [vmem:[%s2 + $0x18] sm:$0xff]
    %vm157 = vcmask 261120
    %v159 = vsel %vm157, %v147, 0
    %v162 = vsel %vm157, %v148, 0
    %164 = vmatprep.subr.mxu0 0.0
    %165 = vmatpush1.msra.mxu0 0.0
    %166 = vmatprep.subr.mxu0 0.0
    %167 = vmatpush1.msra.mxu0 0.0
    %168 = vmatprep.subr.mxu0 0.0
    %169 = vmatpush1.msra.mxu0 0.0
    %170 = vmatprep.subr.mxu0 0.0
    %171 = vmatpush1.msra.mxu0 0.0
    %172 = vmatprep.subr.mxu0 0.0
    %173 = vmatpush1.msra.mxu0 0.0
    %174 = vmatprep.subr.mxu0 0.0
    %175 = vmatpush1.msra.mxu0 0.0
    %176 = vmatprep.subr.mxu0 0.0
    %177 = vmatpush1.msra.mxu0 0.0
    %178 = vmatprep.subr.mxu0 0.0
    %179 = vmatpush1.msra.mxu0 0.0
    %180 = vmatprep.subr.mxu0 0.0
    %181 = vmatpush1.msra.mxu0 0.0
    %182 = vmatprep.subr.mxu0 0.0
    %183 = vmatpush1.msra.mxu0 0.0
    %184 = vmatprep.subr.mxu0 0.0
    %185 = vmatpush1.msra.mxu0 0.0
    %186 = vmatprep.subr.mxu0 0.0
    %187 = vmatpush1.msra.mxu0 0.0
    %188 = vmatprep.subr.mxu0 0.0
    %189 = vmatpush1.msra.mxu0 %v156
    %190 = vmatprep.subr.mxu0 0.0
    %191 = vmatpush1.msra.mxu0 %v155
    %192 = vmatprep.subr.mxu0 0.0
    %193 = vmatpush1.msra.mxu0 %v154
    %194 = vmatprep.subr.mxu0 0.0
    %195 = vmatpush1.msra.mxu0 %v153
    %196 = vmatprep.subr.mxu0 0.0
    %197 = vmatpush2.msra.mxu0 0.0
    %198 = vmatprep.subr.mxu0 0.0
    %199 = vmatpush2.msra.mxu0 0.0
    %200 = vmatprep.subr.mxu0 0.0
    %201 = vmatpush2.msra.mxu0 0.0
    %202 = vmatprep.subr.mxu0 0.0
    %203 = vmatpush2.msra.mxu0 0.0
    %204 = vmatprep.subr.mxu0 0.0
    %205 = vmatpush2.msra.mxu0 0.0
    %206 = vmatprep.subr.mxu0 0.0
    %207 = vmatpush2.msra.mxu0 0.0
    %208 = vmatprep.subr.mxu0 0.0
    %209 = vmatpush2.msra.mxu0 0.0
    %210 = vmatprep.subr.mxu0 0.0
    %211 = vmatpush2.msra.mxu0 0.0
    %212 = vmatprep.subr.mxu0 0.0
    %213 = vmatpush2.msra.mxu0 0.0
    %214 = vmatprep.subr.mxu0 0.0
    %215 = vmatpush2.msra.mxu0 0.0
    %216 = vmatprep.subr.mxu0 0.0
    %217 = vmatpush2.msra.mxu0 0.0
    %218 = vmatprep.subr.mxu0 0.0
    %219 = vmatpush2.msra.mxu0 0.0
    %220 = vmatprep.subr.mxu0 0.0
    %221 = vmatpush2.msra.mxu0 0.0
    %222 = vmatprep.subr.mxu0 0.0
    %223 = vmatpush2.msra.mxu0 0.0
    %224 = vmatprep.subr.mxu0 0.0
    %225 = vmatpush2.msra.mxu0 0.0
    %226 = vmatprep.subr.mxu0 0.0
    %227 = vmatpush2.msra.mxu0 0.0
    %228 = vmatprep.mubr.f32.mxu0 0.0
    %229 = vmatmul.mubr.f32.gmra.mxu0 %v159
    %v230 = vpop.f32.mrf.mxu0
    %v231 = vadd.f32 0.0, %v230
    %v232 = vpop.f32.mrf.mxu0
    %233 = vmatprep.mubr.f32.mxu0 0.0
    %234 = vmatmul.mubr.f32.gmra.mxu0 %v162
    %v235 = vpop.f32.mrf.mxu0
    %v236 = vadd.f32 0.0, %v235
    %v237 = vpop.f32.mrf.mxu0
    %238 = vdwg.mxu0
    %v239 = vld [vmem:[#allocation6] sm:$0xff]
    %v240 = vld [vmem:[#allocation6 + $0x8] sm:$0xff]
    %vm241 = vcmask 130048
    %v243 = vsel %vm241, %v151, 0
    %v246 = vsel %vm241, %v152, 0
    %248 = vmatprep.subr.mxu0 0.0
    %249 = vmatpush1.msra.mxu0 0.0
    %250 = vmatprep.subr.mxu0 0.0
    %251 = vmatpush1.msra.mxu0 0.0
    %252 = vmatprep.subr.mxu0 0.0
    %253 = vmatpush1.msra.mxu0 0.0
    %254 = vmatprep.subr.mxu0 0.0
    %255 = vmatpush1.msra.mxu0 0.0
    %256 = vmatprep.subr.mxu0 0.0
    %257 = vmatpush1.msra.mxu0 0.0
    %258 = vmatprep.subr.mxu0 0.0
    %259 = vmatpush1.msra.mxu0 0.0
    %260 = vmatprep.subr.mxu0 0.0
    %261 = vmatpush1.msra.mxu0 0.0
    %262 = vmatprep.subr.mxu0 0.0
    %263 = vmatpush1.msra.mxu0 0.0
    %264 = vmatprep.subr.mxu0 0.0
    %265 = vmatpush1.msra.mxu0 0.0
    %266 = vmatprep.subr.mxu0 0.0
    %267 = vmatpush1.msra.mxu0 0.0
    %268 = vmatprep.subr.mxu0 0.0
    %269 = vmatpush1.msra.mxu0 0.0
    %270 = vmatprep.subr.mxu0 0.0
    %271 = vmatpush1.msra.mxu0 0.0
    %272 = vmatprep.subr.mxu0 0.0
    %273 = vmatpush1.msra.mxu0 0.0
    %274 = vmatprep.subr.mxu0 0.0
    %275 = vmatpush1.msra.mxu0 0.0
    %276 = vmatprep.subr.mxu0 0.0
    %277 = vmatpush1.msra.mxu0 %v240
    %278 = vmatprep.subr.mxu0 0.0
    %279 = vmatpush1.msra.mxu0 %v239
    %280 = vmatprep.subr.mxu0 0.0
    %281 = vmatpush2.msra.mxu0 0.0
    %282 = vmatprep.subr.mxu0 0.0
    %283 = vmatpush2.msra.mxu0 0.0
    %284 = vmatprep.subr.mxu0 0.0
    %285 = vmatpush2.msra.mxu0 0.0
    %286 = vmatprep.subr.mxu0 0.0
    %287 = vmatpush2.msra.mxu0 0.0
    %288 = vmatprep.subr.mxu0 0.0
    %289 = vmatpush2.msra.mxu0 0.0
    %290 = vmatprep.subr.mxu0 0.0
    %291 = vmatpush2.msra.mxu0 0.0
    %292 = vmatprep.subr.mxu0 0.0
    %293 = vmatpush2.msra.mxu0 0.0
    %294 = vmatprep.subr.mxu0 0.0
    %295 = vmatpush2.msra.mxu0 0.0
    %296 = vmatprep.subr.mxu0 0.0
    %297 = vmatpush2.msra.mxu0 0.0
    %298 = vmatprep.subr.mxu0 0.0
    %299 = vmatpush2.msra.mxu0 0.0
    %300 = vmatprep.subr.mxu0 0.0
    %301 = vmatpush2.msra.mxu0 0.0
    %302 = vmatprep.subr.mxu0 0.0
    %303 = vmatpush2.msra.mxu0 0.0
    %304 = vmatprep.subr.mxu0 0.0
    %305 = vmatpush2.msra.mxu0 0.0
    %306 = vmatprep.subr.mxu0 0.0
    %307 = vmatpush2.msra.mxu0 0.0
    %308 = vmatprep.subr.mxu0 0.0
    %309 = vmatpush2.msra.mxu0 0.0
    %310 = vmatprep.subr.mxu0 0.0
    %311 = vmatpush2.msra.mxu0 0.0
    %312 = vmatprep.mubr.f32.mxu0 0.0
    %313 = vmatmul.mubr.f32.gmra.mxu0 %v243
    %v314 = vpop.f32.mrf.mxu0
    %v315 = vadd.f32 0.0, %v314
    %v316 = vpop.f32.mrf.mxu0
    %317 = vmatprep.mubr.f32.mxu0 0.0
    %318 = vmatmul.mubr.f32.gmra.mxu0 %v246
    %v319 = vpop.f32.mrf.mxu0
    %v320 = vadd.f32 0.0, %v319
    %v321 = vpop.f32.mrf.mxu0
    %322 = vdwg.mxu0
    %v323 = vld [vmem:[#allocation7] sm:$0x1]
    %v325 = vlaneseq
    %v326 = vshrl.u32 %v325, 7
    %v327 = vsub.s32 0, %v326
    %v328 = vrot.slane %v323, %v327
    %v330 = vadd.f32 %v231, %v328
    %v331 = vadd.f32 %v236, %v328
    %v332 = vmax.f32 %v330, 0.0
    %v333 = vmax.f32 %v331, 0.0
    %v334 = vld [vmem:[#allocation9] sm:$0x1]
    %v336 = vlaneseq
    %v337 = vshrl.u32 %v336, 7
    %v338 = vsub.s32 0, %v337
    %v339 = vrot.slane %v334, %v338
    %v341 = vadd.f32 %v315, %v339
    %v342 = vadd.f32 %v320, %v339
    %v343 = vmax.f32 %v341, 0.0
    %v344 = vmax.f32 %v342, 0.0
    %v345 = vld [vmem:[#allocation10] sm:$0xff]
    %v346 = vld [vmem:[#allocation10 + $0x8] sm:$0xff]
    %v348 = vsel %vm241, %v332, 0
    %v351 = vsel %vm241, %v333, 0
    %353 = vmatprep.subr.mxu0 0.0
    %354 = vmatpush1.msra.mxu0 0.0
    %355 = vmatprep.subr.mxu0 0.0
    %356 = vmatpush1.msra.mxu0 0.0
    %357 = vmatprep.subr.mxu0 0.0
    %358 = vmatpush1.msra.mxu0 0.0
    %359 = vmatprep.subr.mxu0 0.0
    %360 = vmatpush1.msra.mxu0 0.0
    %361 = vmatprep.subr.mxu0 0.0
    %362 = vmatpush1.msra.mxu0 0.0
    %363 = vmatprep.subr.mxu0 0.0
    %364 = vmatpush1.msra.mxu0 0.0
    %365 = vmatprep.subr.mxu0 0.0
    %366 = vmatpush1.msra.mxu0 0.0
    %367 = vmatprep.subr.mxu0 0.0
    %368 = vmatpush1.msra.mxu0 0.0
    %369 = vmatprep.subr.mxu0 0.0
    %370 = vmatpush1.msra.mxu0 0.0
    %371 = vmatprep.subr.mxu0 0.0
    %372 = vmatpush1.msra.mxu0 0.0
    %373 = vmatprep.subr.mxu0 0.0
    %374 = vmatpush1.msra.mxu0 0.0
    %375 = vmatprep.subr.mxu0 0.0
    %376 = vmatpush1.msra.mxu0 0.0
    %377 = vmatprep.subr.mxu0 0.0
    %378 = vmatpush1.msra.mxu0 0.0
    %379 = vmatprep.subr.mxu0 0.0
    %380 = vmatpush1.msra.mxu0 0.0
    %381 = vmatprep.subr.mxu0 0.0
    %382 = vmatpush1.msra.mxu0 %v346
    %383 = vmatprep.subr.mxu0 0.0
    %384 = vmatpush1.msra.mxu0 %v345
    %385 = vmatprep.subr.mxu0 0.0
    %386 = vmatpush2.msra.mxu0 0.0
    %387 = vmatprep.subr.mxu0 0.0
    %388 = vmatpush2.msra.mxu0 0.0
    %389 = vmatprep.subr.mxu0 0.0
    %390 = vmatpush2.msra.mxu0 0.0
    %391 = vmatprep.subr.mxu0 0.0
    %392 = vmatpush2.msra.mxu0 0.0
    %393 = vmatprep.subr.mxu0 0.0
    %394 = vmatpush2.msra.mxu0 0.0
    %395 = vmatprep.subr.mxu0 0.0
    %396 = vmatpush2.msra.mxu0 0.0
    %397 = vmatprep.subr.mxu0 0.0
    %398 = vmatpush2.msra.mxu0 0.0
    %399 = vmatprep.subr.mxu0 0.0
    %400 = vmatpush2.msra.mxu0 0.0
    %401 = vmatprep.subr.mxu0 0.0
    %402 = vmatpush2.msra.mxu0 0.0
    %403 = vmatprep.subr.mxu0 0.0
    %404 = vmatpush2.msra.mxu0 0.0
    %405 = vmatprep.subr.mxu0 0.0
    %406 = vmatpush2.msra.mxu0 0.0
    %407 = vmatprep.subr.mxu0 0.0
    %408 = vmatpush2.msra.mxu0 0.0
    %409 = vmatprep.subr.mxu0 0.0
    %410 = vmatpush2.msra.mxu0 0.0
    %411 = vmatprep.subr.mxu0 0.0
    %412 = vmatpush2.msra.mxu0 0.0
    %413 = vmatprep.subr.mxu0 0.0
    %414 = vmatpush2.msra.mxu0 0.0
    %415 = vmatprep.subr.mxu0 0.0
    %416 = vmatpush2.msra.mxu0 0.0
    %417 = vmatprep.mubr.f32.mxu0 0.0
    %418 = vmatmul.mubr.f32.gmra.mxu0 %v348
    %v419 = vpop.f32.mrf.mxu0
    %v420 = vadd.f32 0.0, %v419
    %v421 = vpop.f32.mrf.mxu0
    %422 = vmatprep.mubr.f32.mxu0 0.0
    %423 = vmatmul.mubr.f32.gmra.mxu0 %v351
    %v424 = vpop.f32.mrf.mxu0
    %v425 = vadd.f32 0.0, %v424
    %v426 = vpop.f32.mrf.mxu0
    %427 = vdwg.mxu0
    %430 = vrot.lane.b32.xlu0 %v420, 16
    %v431 = vpop.permute.xlu0 %430
    %432 = vrot.lane.b32.xlu0 %v425, 16
    %v433 = vpop.permute.xlu0 %432
    %v436 = vadd.f32 %v231, %v431
    %v437 = vadd.f32 %v236, %v433
    %v438 = vld [vmem:[#allocation12] sm:$0x1]
    %v440 = vlaneseq
    %v441 = vshrl.u32 %v440, 7
    %v442 = vsub.s32 0, %v441
    %v443 = vrot.slane %v438, %v442
    %444 = vrot.lane.b32.xlu0 %v443, 16
    %v445 = vpop.permute.xlu0 %444
    %v447 = vadd.f32 %v436, %v445
    %v448 = vadd.f32 %v437, %v445
    %v449 = vmax.f32 %v447, 0.0
    %v450 = vmax.f32 %v448, 0.0
    %v451 = vld [vmem:[%s7] sm:$0xff]
    %v452 = vld [vmem:[%s7 + $0x8] sm:$0xff]
    %v454 = vsel %vm241, %v343, 0
    %v457 = vsel %vm241, %v344, 0
    %459 = vmatprep.subr.mxu0 0.0
    %460 = vmatpush1.msra.mxu0 0.0
    %461 = vmatprep.subr.mxu0 0.0
    %462 = vmatpush1.msra.mxu0 0.0
    %463 = vmatprep.subr.mxu0 0.0
    %464 = vmatpush1.msra.mxu0 0.0
    %465 = vmatprep.subr.mxu0 0.0
    %466 = vmatpush1.msra.mxu0 0.0
    %467 = vmatprep.subr.mxu0 0.0
    %468 = vmatpush1.msra.mxu0 0.0
    %469 = vmatprep.subr.mxu0 0.0
    %470 = vmatpush1.msra.mxu0 0.0
    %471 = vmatprep.subr.mxu0 0.0
    %472 = vmatpush1.msra.mxu0 0.0
    %473 = vmatprep.subr.mxu0 0.0
    %474 = vmatpush1.msra.mxu0 0.0
    %475 = vmatprep.subr.mxu0 0.0
    %476 = vmatpush1.msra.mxu0 0.0
    %477 = vmatprep.subr.mxu0 0.0
    %478 = vmatpush1.msra.mxu0 0.0
    %479 = vmatprep.subr.mxu0 0.0
    %480 = vmatpush1.msra.mxu0 0.0
    %481 = vmatprep.subr.mxu0 0.0
    %482 = vmatpush1.msra.mxu0 0.0
    %483 = vmatprep.subr.mxu0 0.0
    %484 = vmatpush1.msra.mxu0 0.0
    %485 = vmatprep.subr.mxu0 0.0
    %486 = vmatpush1.msra.mxu0 0.0
    %487 = vmatprep.subr.mxu0 0.0
    %488 = vmatpush1.msra.mxu0 %v452
    %489 = vmatprep.subr.mxu0 0.0
    %490 = vmatpush1.msra.mxu0 %v451
    %491 = vmatprep.subr.mxu0 0.0
    %492 = vmatpush2.msra.mxu0 0.0
    %493 = vmatprep.subr.mxu0 0.0
    %494 = vmatpush2.msra.mxu0 0.0
    %495 = vmatprep.subr.mxu0 0.0
    %496 = vmatpush2.msra.mxu0 0.0
    %497 = vmatprep.subr.mxu0 0.0
    %498 = vmatpush2.msra.mxu0 0.0
    %499 = vmatprep.subr.mxu0 0.0
    %500 = vmatpush2.msra.mxu0 0.0
    %501 = vmatprep.subr.mxu0 0.0
    %502 = vmatpush2.msra.mxu0 0.0
    %503 = vmatprep.subr.mxu0 0.0
    %504 = vmatpush2.msra.mxu0 0.0
    %505 = vmatprep.subr.mxu0 0.0
    %506 = vmatpush2.msra.mxu0 0.0
    %507 = vmatprep.subr.mxu0 0.0
    %508 = vmatpush2.msra.mxu0 0.0
    %509 = vmatprep.subr.mxu0 0.0
    %510 = vmatpush2.msra.mxu0 0.0
    %511 = vmatprep.subr.mxu0 0.0
    %512 = vmatpush2.msra.mxu0 0.0
    %513 = vmatprep.subr.mxu0 0.0
    %514 = vmatpush2.msra.mxu0 0.0
    %515 = vmatprep.subr.mxu0 0.0
    %516 = vmatpush2.msra.mxu0 0.0
    %517 = vmatprep.subr.mxu0 0.0
    %518 = vmatpush2.msra.mxu0 0.0
    %519 = vmatprep.subr.mxu0 0.0
    %520 = vmatpush2.msra.mxu0 0.0
    %521 = vmatprep.subr.mxu0 0.0
    %522 = vmatpush2.msra.mxu0 0.0
    %523 = vmatprep.mubr.f32.mxu0 0.0
    %524 = vmatmul.mubr.f32.gmra.mxu0 %v454
    %v525 = vpop.f32.mrf.mxu0
    %v526 = vadd.f32 0.0, %v525
    %v527 = vpop.f32.mrf.mxu0
    %528 = vmatprep.mubr.f32.mxu0 0.0
    %529 = vmatmul.mubr.f32.gmra.mxu0 %v457
    %v530 = vpop.f32.mrf.mxu0
    %v531 = vadd.f32 0.0, %v530
    %v532 = vpop.f32.mrf.mxu0
    %533 = vdwg.mxu0
    %536 = vrot.lane.b32.xlu0 %v526, 16
    %v537 = vpop.permute.xlu0 %536
    %538 = vrot.lane.b32.xlu0 %v531, 16
    %v539 = vpop.permute.xlu0 %538
    %v542 = vadd.f32 %v315, %v537
    %v543 = vadd.f32 %v320, %v539
    %v544 = vld [vmem:[#allocation13] sm:$0x1]
    %v546 = vlaneseq
    %v547 = vshrl.u32 %v546, 7
    %v548 = vsub.s32 0, %v547
    %v549 = vrot.slane %v544, %v548
    %550 = vrot.lane.b32.xlu0 %v549, 16
    %v551 = vpop.permute.xlu0 %550
    %v553 = vadd.f32 %v542, %v551
    %v554 = vadd.f32 %v543, %v551
    %v555 = vmax.f32 %v553, 0.0
    %v556 = vmax.f32 %v554, 0.0
    %v557 = vld [vmem:[%s10] sm:$0xff]
    %v558 = vld [vmem:[%s10 + $0x8] sm:$0xff]
    %v559 = vld [vmem:[%s11] sm:$0xff]
    %v560 = vld [vmem:[%s11 + $0x8] sm:$0xff]
    %563 = vrot.lane.b32.xlu0 %v555, 112
    %v564 = vpop.permute.xlu0 %563
    %565 = vrot.lane.b32.xlu0 %v556, 112
    %v566 = vpop.permute.xlu0 %565
    %v567 = vsel %vm241, %v564, 0
    %v569 = vsel %vm241, %v566, 0
    %571 = vmatprep.subr.mxu0 0.0
    %572 = vmatpush1.msra.mxu0 0.0
    %573 = vmatprep.subr.mxu0 0.0
    %574 = vmatpush1.msra.mxu0 0.0
    %575 = vmatprep.subr.mxu0 0.0
    %576 = vmatpush1.msra.mxu0 0.0
    %577 = vmatprep.subr.mxu0 0.0
    %578 = vmatpush1.msra.mxu0 0.0
    %579 = vmatprep.subr.mxu0 0.0
    %580 = vmatpush1.msra.mxu0 0.0
    %581 = vmatprep.subr.mxu0 0.0
    %582 = vmatpush1.msra.mxu0 0.0
    %583 = vmatprep.subr.mxu0 0.0
    %584 = vmatpush1.msra.mxu0 0.0
    %585 = vmatprep.subr.mxu0 0.0
    %586 = vmatpush1.msra.mxu0 0.0
    %587 = vmatprep.subr.mxu0 0.0
    %588 = vmatpush1.msra.mxu0 0.0
    %589 = vmatprep.subr.mxu0 0.0
    %590 = vmatpush1.msra.mxu0 0.0
    %591 = vmatprep.subr.mxu0 0.0
    %592 = vmatpush1.msra.mxu0 0.0
    %593 = vmatprep.subr.mxu0 0.0
    %594 = vmatpush1.msra.mxu0 0.0
    %595 = vmatprep.subr.mxu0 0.0
    %596 = vmatpush1.msra.mxu0 0.0
    %597 = vmatprep.subr.mxu0 0.0
    %598 = vmatpush1.msra.mxu0 0.0
    %599 = vmatprep.subr.mxu0 0.0
    %600 = vmatpush1.msra.mxu0 %v560
    %601 = vmatprep.subr.mxu0 0.0
    %602 = vmatpush1.msra.mxu0 %v559
    %603 = vmatprep.subr.mxu0 0.0
    %604 = vmatpush2.msra.mxu0 0.0
    %605 = vmatprep.subr.mxu0 0.0
    %606 = vmatpush2.msra.mxu0 0.0
    %607 = vmatprep.subr.mxu0 0.0
    %608 = vmatpush2.msra.mxu0 0.0
    %609 = vmatprep.subr.mxu0 0.0
    %610 = vmatpush2.msra.mxu0 0.0
    %611 = vmatprep.subr.mxu0 0.0
    %612 = vmatpush2.msra.mxu0 0.0
    %613 = vmatprep.subr.mxu0 0.0
    %614 = vmatpush2.msra.mxu0 0.0
    %615 = vmatprep.subr.mxu0 0.0
    %616 = vmatpush2.msra.mxu0 0.0
    %617 = vmatprep.subr.mxu0 0.0
    %618 = vmatpush2.msra.mxu0 0.0
    %619 = vmatprep.subr.mxu0 0.0
    %620 = vmatpush2.msra.mxu0 0.0
    %621 = vmatprep.subr.mxu0 0.0
    %622 = vmatpush2.msra.mxu0 0.0
    %623 = vmatprep.subr.mxu0 0.0
    %624 = vmatpush2.msra.mxu0 0.0
    %625 = vmatprep.subr.mxu0 0.0
    %626 = vmatpush2.msra.mxu0 0.0
    %627 = vmatprep.subr.mxu0 0.0
    %628 = vmatpush2.msra.mxu0 0.0
    %629 = vmatprep.subr.mxu0 0.0
    %630 = vmatpush2.msra.mxu0 0.0
    %631 = vmatprep.subr.mxu0 0.0
    %632 = vmatpush2.msra.mxu0 0.0
    %633 = vmatprep.subr.mxu0 0.0
    %634 = vmatpush2.msra.mxu0 0.0
    %635 = vmatprep.mubr.f32.mxu0 0.0
    %636 = vmatmul.mubr.f32.gmra.mxu0 %v567
    %v637 = vpop.f32.mrf.mxu0
    %v638 = vadd.f32 0.0, %v637
    %v639 = vpop.f32.mrf.mxu0
    %640 = vmatprep.mubr.f32.mxu0 0.0
    %641 = vmatmul.mubr.f32.gmra.mxu0 %v569
    %v642 = vpop.f32.mrf.mxu0
    %v643 = vadd.f32 0.0, %v642
    %v644 = vpop.f32.mrf.mxu0
    %645 = vdwg.mxu0
    %648 = vrot.lane.b32.xlu0 %v449, 112
    %v649 = vpop.permute.xlu0 %648
    %650 = vrot.lane.b32.xlu0 %v450, 112
    %v651 = vpop.permute.xlu0 %650
    %v652 = vsel %vm241, %v649, 0
    %v654 = vsel %vm241, %v651, 0
    %656 = vmatprep.subr.mxu0 0.0
    %657 = vmatpush1.msra.mxu0 0.0
    %658 = vmatprep.subr.mxu0 0.0
    %659 = vmatpush1.msra.mxu0 0.0
    %660 = vmatprep.subr.mxu0 0.0
    %661 = vmatpush1.msra.mxu0 0.0
    %662 = vmatprep.subr.mxu0 0.0
    %663 = vmatpush1.msra.mxu0 0.0
    %664 = vmatprep.subr.mxu0 0.0
    %665 = vmatpush1.msra.mxu0 0.0
    %666 = vmatprep.subr.mxu0 0.0
    %667 = vmatpush1.msra.mxu0 0.0
    %668 = vmatprep.subr.mxu0 0.0
    %669 = vmatpush1.msra.mxu0 0.0
    %670 = vmatprep.subr.mxu0 0.0
    %671 = vmatpush1.msra.mxu0 0.0
    %672 = vmatprep.subr.mxu0 0.0
    %673 = vmatpush1.msra.mxu0 0.0
    %674 = vmatprep.subr.mxu0 0.0
    %675 = vmatpush1.msra.mxu0 0.0
    %676 = vmatprep.subr.mxu0 0.0
    %677 = vmatpush1.msra.mxu0 0.0
    %678 = vmatprep.subr.mxu0 0.0
    %679 = vmatpush1.msra.mxu0 0.0
    %680 = vmatprep.subr.mxu0 0.0
    %681 = vmatpush1.msra.mxu0 0.0
    %682 = vmatprep.subr.mxu0 0.0
    %683 = vmatpush1.msra.mxu0 0.0
    %684 = vmatprep.subr.mxu0 0.0
    %685 = vmatpush1.msra.mxu0 %v558
    %686 = vmatprep.subr.mxu0 0.0
    %687 = vmatpush1.msra.mxu0 %v557
    %688 = vmatprep.subr.mxu0 0.0
    %689 = vmatpush2.msra.mxu0 0.0
    %690 = vmatprep.subr.mxu0 0.0
    %691 = vmatpush2.msra.mxu0 0.0
    %692 = vmatprep.subr.mxu0 0.0
    %693 = vmatpush2.msra.mxu0 0.0
    %694 = vmatprep.subr.mxu0 0.0
    %695 = vmatpush2.msra.mxu0 0.0
    %696 = vmatprep.subr.mxu0 0.0
    %697 = vmatpush2.msra.mxu0 0.0
    %698 = vmatprep.subr.mxu0 0.0
    %699 = vmatpush2.msra.mxu0 0.0
    %700 = vmatprep.subr.mxu0 0.0
    %701 = vmatpush2.msra.mxu0 0.0
    %702 = vmatprep.subr.mxu0 0.0
    %703 = vmatpush2.msra.mxu0 0.0
    %704 = vmatprep.subr.mxu0 0.0
    %705 = vmatpush2.msra.mxu0 0.0
    %706 = vmatprep.subr.mxu0 0.0
    %707 = vmatpush2.msra.mxu0 0.0
    %708 = vmatprep.subr.mxu0 0.0
    %709 = vmatpush2.msra.mxu0 0.0
    %710 = vmatprep.subr.mxu0 0.0
    %711 = vmatpush2.msra.mxu0 0.0
    %712 = vmatprep.subr.mxu0 0.0
    %713 = vmatpush2.msra.mxu0 0.0
    %714 = vmatprep.subr.mxu0 0.0
    %715 = vmatpush2.msra.mxu0 0.0
    %716 = vmatprep.subr.mxu0 0.0
    %717 = vmatpush2.msra.mxu0 0.0
    %718 = vmatprep.subr.mxu0 0.0
    %719 = vmatpush2.msra.mxu0 0.0
    %720 = vmatprep.mubr.f32.mxu0 0.0
    %721 = vmatmul.mubr.f32.gmra.mxu0 %v652
    %v722 = vpop.f32.mrf.mxu0
    %v723 = vadd.f32 %v638, %v722
    %v724 = vpop.f32.mrf.mxu0
    %725 = vmatprep.mubr.f32.mxu0 0.0
    %726 = vmatmul.mubr.f32.gmra.mxu0 %v654
    %v727 = vpop.f32.mrf.mxu0
    %v728 = vadd.f32 %v643, %v727
    %v729 = vpop.f32.mrf.mxu0
    %730 = vdwg.mxu0
    %v731 = vld [vmem:[%s12] sm:$0x1]
    %v733 = vlaneseq
    %v734 = vshrl.u32 %v733, 7
    %v735 = vsub.s32 0, %v734
    %v736 = vrot.slane %v731, %v735
    %v738 = vadd.f32 %v723, %v736
    %v739 = vadd.f32 %v728, %v736
    %v740 = vsub.f32 0.0, %v738
    %v741 = vsub.f32 0.0, %v739
    %v742 = vmul.f32 %v740, 1.442695
    %v743 = vpow.pop %v742
    %v744 = vmul.f32 %v741, 1.442695
    %v745 = vpow.pop %v744
    %v746 = vadd.f32 %v743, 1.0
    %v747 = vadd.f32 %v745, 1.0
    %v748 = vrcp.pop %v746
    %v749 = vrcp.pop %v747
    %vm750 = vcmask 15360
    %751 = vst.msk [vmem:[%s13] sm:$0xff] %vm750, %v748
    %752 = vst.msk [vmem:[%s13 + $0x8] sm:$0xff] %vm750, %v749
    // Predicated region
    $region86: #{tpu_custom_call.1} parent=1 // pred_check
      _
    $region87: #{tpu_custom_call.1} parent=1 // pred_check_branch
      %754 = sbr.rel (0) target = $region89
    $region88: #{tpu_custom_call.1} parent=1 // pred_region
      _
    $region89: #{tpu_custom_call.1} parent=1 // pred_fallthru
      _
    // Predicated region
    $region90: #{tpu_custom_call.1} parent=1 // pred_check
      _
    $region91: #{tpu_custom_call.1} parent=1 // pred_check_branch
      %756 = sbr.rel (0) target = $region93
    $region92: #{tpu_custom_call.1} parent=1 // pred_region
      _
    $region93: #{tpu_custom_call.1} parent=1 // pred_fallthru
      _
    %757 = vsyncpa [#allocation3], 1
    %758 = vsyncpa [#allocation5], 1
    %759 = vsyncpa [#allocation8], 1
    %760 = vsyncpa [#allocation11], 1
    %761 = vsyncpa [#allocation14], 1

</llo_original>
